<compile_context>
chip_gen: v6e
topology: v6e:2x2x1
jax: 0.10.0
libtpu: 0.0.40
codegen_flags: <defaults>
</compile_context>

<pallas_src>
import functools

import jax
import jax.numpy as jnp
from jax.experimental import pallas as pl
from jax.experimental.pallas import tpu as pltpu


# VMEM cost of one row of a lane-padded (TB, 1) f32/i32 block: 1 value in a
# 128-lane row of an (8, 128) tile -> 512 bytes of VMEM per batch row.
_LANE_PAD_BYTES = 512


def _vmem_budgets():
    """Returns (vmem_limit_bytes, per_buffer_set_budget_bytes), generation aware."""
    try:
        cap = int(pltpu.get_tpu_info().vmem_capacity_bytes)
        if cap <= 0:
            raise ValueError(cap)
    except Exception:
        cap = 64 << 20  # assume the tightest generation (v7x: 64 MiB/core)
    # Leave ~1/3 headroom for pipeline slack / internal scratch; never ask for
    # more than 64 MiB (v5e/v6e have 128 MiB physical, v7x only 64 MiB).
    vmem_limit = min(int(cap * 0.65), 64 << 20)
    # Inputs/outputs are double-buffered -> total live ~= 2 * budget (+ slack).
    per_buffer_budget = max(4 << 20, min(16 << 20, vmem_limit // 2 - (4 << 20)))
    return vmem_limit, per_buffer_budget


def _pick_tile_b(B: int, bytes_per_row: int, budget_bytes: int) -> int:
    """Largest multiple-of-8 row count whose per-buffer working set fits the budget."""
    rows = max(8, (budget_bytes // max(bytes_per_row, 1)) // 8 * 8)
    return B if rows >= B else rows


def _log_marginal_kernel(*refs, log_prob_weight: float, reduction: str,
                         total_b: int, tile_b: int, has_lp: bool, ragged: bool):
    if has_lp:
        alpha_ref, y_ref, lp_ref, out_ref = refs
    else:
        alpha_ref, y_ref, out_ref = refs
        lp_ref = None

    alpha = alpha_ref[...]                                      # [TB, C] f32
    y = y_ref[...]                                              # [TB, 1] i32

    # a0 = sum over classes (lane reduction -> XLU)
    a0 = jnp.sum(alpha, axis=-1, keepdims=True)                 # [TB, 1]

    # gather alpha[b, y[b]] via one-hot mask over the lane (class) axis
    col = jax.lax.broadcasted_iota(jnp.int32, alpha.shape, 1)   # [TB, C]
    a_true = jnp.sum(jnp.where(col == y, alpha, 0.0),
                     axis=-1, keepdims=True)                    # [TB, 1]

    # one EUP pass over a [TB, 2] column pair instead of two over [TB, 1]
    logs = jnp.log(jnp.concatenate([a0, a_true], axis=-1))      # [TB, 2]
    loss = logs[:, 0:1] - logs[:, 1:2]                          # [TB, 1]
    if has_lp:
        loss = loss - log_prob_weight * lp_ref[...]

    if reduction == "none":
        out_ref[...] = loss
        return

    # mean / sum: every grid step owns a private (1,1,1) partial-sum block, so
    # the grid axis stays "parallel" (no resident accumulator, no cross-step carry).
    if not ragged:
        out_ref[...] = jnp.sum(loss).reshape(1, 1, 1)
        return

    pid = pl.program_id(0)
    last = pl.num_programs(0) - 1

    @pl.when(pid != last)
    def _():
        out_ref[...] = jnp.sum(loss).reshape(1, 1, 1)

    @pl.when(pid == last)
    def _():
        # Mask the rows of the ragged tail.  Keep this a select (jnp.where),
        # NOT a multiply: the padded rows may hold log(garbage) = NaN/Inf.
        row = pid * tile_b + jax.lax.broadcasted_iota(jnp.int32, loss.shape, 0)
        out_ref[...] = jnp.sum(jnp.where(row < total_b, loss, 0.0)).reshape(1, 1, 1)


def log_marginal_loss(alpha, y_true, log_prob=None, *,
                      entropy_weight: float = 0.0,
                      log_prob_weight: float = 0.0,
                      reduction: str = "mean",
                      tile_b: int | None = None):
    """Pallas-backed equivalent of LogMarginalLoss.forward.

    alpha:    [B, C] float32, Dirichlet concentration parameters (alpha > 0).
    y_true:   [B]    int32 class indices.
    log_prob: [B]    float32 log density of embeddings (only used if
              log_prob_weight > 0).
    """
    assert entropy_weight == 0.0, "entropy regularizer not supported (see TODO)"
    assert reduction in ("mean", "sum", "none")
    B, C = alpha.shape

    alpha = alpha.astype(jnp.float32)
    y2d = y_true.astype(jnp.int32).reshape(B, 1)

    has_lp = float(log_prob_weight) > 0.0
    inputs = [alpha, y2d]
    if has_lp:
        assert log_prob is not None
        inputs.append(log_prob.astype(jnp.float32).reshape(B, 1))

    vmem_limit, budget = _vmem_budgets()

    # VMEM bytes per batch row of one buffer set: dense alpha tile plus the
    # lane-padded (TB, 1) side streams charged at 512 B/row each.
    bytes_per_row = 4 * C + _LANE_PAD_BYTES                    # alpha + labels
    if has_lp:
        bytes_per_row += _LANE_PAD_BYTES                       # log_prob stream
    if reduction == "none":
        bytes_per_row += _LANE_PAD_BYTES                       # (TB, 1) loss output

    if tile_b is None:
        tile_b = _pick_tile_b(B, bytes_per_row, budget)
    tile_b = min(tile_b, B)
    if tile_b < B:
        assert tile_b % 8 == 0, "batch tile must be a multiple of 8 sublanes"

    num_tiles = pl.cdiv(B, tile_b)
    ragged = (B % tile_b) != 0
    grid = (num_tiles,)

    in_specs = [pl.BlockSpec((tile_b, C), lambda i: (i, 0)),
                pl.BlockSpec((tile_b, 1), lambda i: (i, 0))]
    if has_lp:
        in_specs.append(pl.BlockSpec((tile_b, 1), lambda i: (i, 0)))

    if reduction in ("mean", "sum"):
        # one private partial-sum block per grid step -> axis can stay "parallel"
        out_shape = jax.ShapeDtypeStruct((num_tiles, 1, 1), jnp.float32)
        out_spec = pl.BlockSpec((1, 1, 1), lambda i: (i, 0, 0))
        out_bytes = num_tiles * 4
    else:
        out_shape = jax.ShapeDtypeStruct((B, 1), jnp.float32)
        out_spec = pl.BlockSpec((tile_b, 1), lambda i: (i, 0))
        out_bytes = B * 4

    kernel = functools.partial(_log_marginal_kernel,
                               log_prob_weight=float(log_prob_weight),
                               reduction=reduction,
                               total_b=B, tile_b=tile_b,
                               has_lp=has_lp, ragged=ragged)

    bytes_accessed = 4 * B * C + 4 * B + (4 * B if has_lp else 0) + out_bytes
    cost = pl.CostEstimate(flops=int(B * (2 * C + 8)),
                           transcendentals=int(2 * B),
                           bytes_accessed=int(bytes_accessed))

    out = pl.pallas_call(
        kernel,
        out_shape=out_shape,
        grid=grid,
        in_specs=in_specs,
        out_specs=out_spec,
        compiler_params=pltpu.CompilerParams(
            dimension_semantics=("parallel",),
            vmem_limit_bytes=vmem_limit,
        ),
        cost_estimate=cost,
    )(*inputs)

    if reduction == "none":
        return out[:, 0]
    total = jnp.sum(out)      # tiny reduction over per-tile partials (done in XLA)
    if reduction == "mean":
        # NOTE: partial sums are combined in f32; for very large B this differs
        # from a single-pass sum only at the ~1e-7 relative level.
        total = total / B
    return total


def _reference(alpha, y_true, log_prob, *, log_prob_weight=0.0, reduction="mean"):
    a0 = alpha.sum(-1)
    a_true = jnp.take_along_axis(alpha, y_true[:, None], axis=-1)[:, 0]
    loss = jnp.log(a0) - jnp.log(a_true)
    if log_prob_weight > 0.0:
        loss = loss - log_prob_weight * log_prob
    if reduction == "mean":
        return loss.mean()
    if reduction == "sum":
        return loss.sum()
    return loss


if __name__ == "__main__":
    key = jax.random.PRNGKey(0)
    k1, k2, k3 = jax.random.split(key, 3)

    # small shapes consistent with the module: batch=8, classes=16
    B, C = 8, 16
    alpha = jax.nn.softplus(jax.random.normal(k1, (B, C), dtype=jnp.float32)) + 1.0
    y_true = jax.random.randint(k2, (B,), 0, C, dtype=jnp.int32)
    log_prob = jax.random.normal(k3, (B,), dtype=jnp.float32)

    out = jax.block_until_ready(
        log_marginal_loss(alpha, y_true, log_prob, reduction="mean"))
    ref = _reference(alpha, y_true, log_prob, reduction="mean")
    assert jnp.allclose(out, ref, rtol=1e-5, atol=1e-5), (out, ref)

    # multi-tile grid + ragged last tile + all reductions (B=20, TB=8)
    B2, C2 = 20, 16
    k4, k5, k6 = jax.random.split(jax.random.PRNGKey(1), 3)
    alpha2 = jax.nn.softplus(jax.random.normal(k4, (B2, C2), dtype=jnp.float32)) + 1.0
    y2 = jax.random.randint(k5, (B2,), 0, C2, dtype=jnp.int32)
    lp2 = jax.random.normal(k6, (B2,), dtype=jnp.float32)

    for red in ("mean", "sum", "none"):
        o = jax.block_until_ready(
            log_marginal_loss(alpha2, y2, lp2, reduction=red, tile_b=8))
        r = _reference(alpha2, y2, lp2, reduction=red)
        assert jnp.allclose(o, r, rtol=1e-5, atol=1e-5), (red, o, r)

    # log_prob_weight > 0 path (extra input actually wired in)
    o = jax.block_until_ready(
        log_marginal_loss(alpha2, y2, lp2, reduction="mean",
                          log_prob_weight=0.5, tile_b=8))
    r = _reference(alpha2, y2, lp2, log_prob_weight=0.5, reduction="mean")
    assert jnp.allclose(o, r, rtol=1e-5, atol=1e-5), (o, r)

    # larger batch: auto tile picker (single full-array tile) and an explicit
    # multi-tile ragged split exercising the "parallel" partial-sum path
    B3, C3 = 1000, 32
    k7, k8, k9 = jax.random.split(jax.random.PRNGKey(2), 3)
    alpha3 = jax.nn.softplus(jax.random.normal(k7, (B3, C3), dtype=jnp.float32)) + 1.0
    y3 = jax.random.randint(k8, (B3,), 0, C3, dtype=jnp.int32)
    lp3 = jax.random.normal(k9, (B3,), dtype=jnp.float32)

    for tb in (None, 256):
        for red in ("mean", "sum", "none"):
            o = jax.block_until_ready(
                log_marginal_loss(alpha3, y3, lp3, reduction=red, tile_b=tb))
            r = _reference(alpha3, y3, lp3, reduction=red)
            assert jnp.allclose(o, r, rtol=1e-4, atol=1e-5), (tb, red, o, r)

    print("KERNEL_OK")
</pallas_src>

<mosaic_0001>
module attributes {stable_mosaic.version = 11 : i64} {
  func.func @_log_marginal_kernel(%arg0: i32, %arg1: memref<8x16xf32, #tpu.memory_space<vmem>>, %arg2: memref<8x1xi32, #tpu.memory_space<vmem>>, %arg3: memref<1x1x1xf32, #tpu.memory_space<vmem>>) attributes {dimension_semantics = [#tpu.dimension_semantics<parallel>], iteration_bounds = array<i64: 1>, scalar_prefetch = 0 : i64, scratch_operands = 0 : i64, tpu.core_type = #tpu.core_type<tc>, window_params = [{transform_indices = @transform_0, window_bounds = array<i64: 8, 16>}, {transform_indices = @transform_1, window_bounds = array<i64: 8, 1>}, {transform_indices = @transform_2, window_bounds = array<i64: 1, 1, 1>}]} {
    %c0 = arith.constant 0 : index
    %c0_0 = arith.constant 0 : index
    %0 = vector.load %arg1[%c0, %c0_0] : memref<8x16xf32, #tpu.memory_space<vmem>>, vector<8x16xf32>
    %c0_1 = arith.constant 0 : index
    %c0_2 = arith.constant 0 : index
    %1 = vector.load %arg2[%c0_1, %c0_2] : memref<8x1xi32, #tpu.memory_space<vmem>>, vector<8x1xi32>
    %cst = arith.constant dense<0.000000e+00> : vector<8xf32>
    %2 = vector.multi_reduction <add>, %0, %cst [1] : vector<8x16xf32> to vector<8xf32>
    %3 = vector.shape_cast %2 : vector<8xf32> to vector<8x1xf32>
    %4 = tpu.iota {dimensions = array<i32: 1>} : vector<8x16xi32>
    %5 = vector.broadcast %1 : vector<8x1xi32> to vector<8x16xi32>
    %6 = arith.cmpi eq, %4, %5 : vector<8x16xi32>
    %cst_3 = arith.constant 0.000000e+00 : f32
    %7 = vector.broadcast %cst_3 : f32 to vector<8x16xf32>
    %8 = arith.select %6, %0, %7 : vector<8x16xi1>, vector<8x16xf32>
    %cst_4 = arith.constant dense<0.000000e+00> : vector<8xf32>
    %9 = vector.multi_reduction <add>, %8, %cst_4 [1] : vector<8x16xf32> to vector<8xf32>
    %10 = vector.shape_cast %9 : vector<8xf32> to vector<8x1xf32>
    %11 = tpu.concatenate %3, %10 in 1 : vector<8x1xf32>, vector<8x1xf32> -> vector<8x2xf32>
    %12 = math.log %11 : vector<8x2xf32>
    %13 = vector.extract_strided_slice %12 {offsets = [0, 0], sizes = [8, 1], strides = [1, 1]} : vector<8x2xf32> to vector<8x1xf32>
    %14 = vector.extract_strided_slice %12 {offsets = [0, 1], sizes = [8, 1], strides = [1, 1]} : vector<8x2xf32> to vector<8x1xf32>
    %15 = arith.subf %13, %14 : vector<8x1xf32>
    %16 = vector.shape_cast %15 : vector<8x1xf32> to vector<1x8x1xf32>
    %cst_5 = arith.constant dense<0.000000e+00> : vector<1xf32>
    %17 = vector.multi_reduction <add>, %16, %cst_5 [1, 2] : vector<1x8x1xf32> to vector<1xf32>
    %18 = vector.shape_cast %17 : vector<1xf32> to vector<1x1x1xf32>
    %19 = vector.extract %18[0, 0, 0] : f32 from vector<1x1x1xf32>
    %20 = vector.broadcast %19 : f32 to vector<1x1x1xf32>
    %c0_6 = arith.constant 0 : index
    %c0_7 = arith.constant 0 : index
    %c0_8 = arith.constant 0 : index
    %21 = vector.load %arg3[%c0_6, %c0_7, %c0_8] : memref<1x1x1xf32, #tpu.memory_space<vmem>>, vector<1x1x1xf32>
    tpu.vector_store %arg3[%c0_6, %c0_7, %c0_8], %20 {strides = array<i32>} : memref<1x1x1xf32, #tpu.memory_space<vmem>>, vector<1x1x1xf32>,
    return
  }
  func.func @transform_0(%arg0: i32) -> (i32, i32) {
    %c0_i32 = arith.constant 0 : i32
    %c0_i32_0 = arith.constant 0 : i32
    return %arg0, %c0_i32 : i32, i32
  }
  func.func @transform_1(%arg0: i32) -> (i32, i32) {
    %c0_i32 = arith.constant 0 : i32
    %c0_i32_0 = arith.constant 0 : i32
    return %arg0, %c0_i32 : i32, i32
  }
  func.func @transform_2(%arg0: i32) -> (i32, i32, i32) {
    %c0_i32 = arith.constant 0 : i32
    %c0_i32_0 = arith.constant 0 : i32
    %c0_i32_1 = arith.constant 0 : i32
    return %arg0, %c0_i32, %c0_i32_0 : i32, i32, i32
  }
}

</mosaic_0001>

<llo_original>
// kernel: tpu_custom_call.1
$region0: #{tpu_custom_call.1}
  #allocation0 [shape = 'u32[]', space=smem, size = 0x4, offset = 0x4, fixed_abs, tag = 'smem constant byte address 0x4 - core index']
  #allocation1 [shape = 'u32[144,128]{1,0:T(1,128)}', space=vmem, size = 0x12000, scoped, tag = 'internal scratch']
  %s0 = inlined_call_operand.vmem [shape: f32[8,16], index: 0, kind: input, shape index: {}]
  %s1 = inlined_call_operand.vmem [shape: s32[8,1], index: 1, kind: input, shape index: {}]
  %s2 = inlined_call_operand.hbm [shape: f32[1,1,1], index: 2, kind: output, shape index: {}]
  %s3 = sld [smem:[#allocation0]]
  $region18: #{tpu_custom_call.1} parent=0
    _
  %s5 = ssub.s32 1, %s3
  %s6 = scalar_select 0, %s5, %s3
  $region1: #{tpu_custom_call.1} parent=0
    #allocation2 [shape = 'u8[512]{0}', space=vmem, size = 0x400, scoped, tag = 'output window, operand 0, single buffered']
    #allocation3 [shape = 's32[1]{0}', space=sflag, size = 0x4, scoped, tag = 'scoped memory for tpu_custom_call.1']
    %7 = vsyncpa [#allocation3], 0
    // Predicated region
    $region2: #{tpu_custom_call.1} parent=1 // pred_check
      _
    $region3: #{tpu_custom_call.1} parent=1 // pred_check_branch
      %9 = sbr.rel (0) target = $region5
    $region4: #{tpu_custom_call.1} parent=1 // pred_region
      _
    $region5: #{tpu_custom_call.1} parent=1 // pred_fallthru
      _
    // Predicated region
    $region6: #{tpu_custom_call.1} parent=1 // pred_check
      _
    $region7: #{tpu_custom_call.1} parent=1 // pred_check_branch
      %11 = sbr.rel (0) target = $region9
    $region8: #{tpu_custom_call.1} parent=1 // pred_region
      _
    $region9: #{tpu_custom_call.1} parent=1 // pred_fallthru
      _
    %v12 = vld [vmem:[%s0] sm:$0xff]
    %v13 = vld [vmem:[%s1] sm:$0xff]
    %vm14 = vcmask 130048
    %v15 = vsel %vm14, %v12, 0.0
    %16 = vadd.xlane.f32.xlu0 %v15
    %v17 = vpop.xlane.xlu0 %16
    %v18 = vlaneseq
    %v19 = vand.u32 %v18, 127
    %20 = vset.pattern.permute.xlu0 0
    %21 = vperm.xlu0 %20, %v13
    %v22 = vpop.permute.xlu0 %21
    %vm23 = vcmp.eq.s32.totalorder %v19, %v22
    %v24 = vsel %vm23, %v12, 0.0
    %v25 = vsel %vm14, %v24, 0.0
    %26 = vadd.xlane.f32.xlu0 %v25
    %v27 = vpop.xlane.xlu0 %26
    %vm28 = vcmask 7168
    %v29 = vsel %vm28, %v17, %v27
    %v30 = vlog2.pop %v29
    %v31 = vmul.f32 %v30, 0.6931472
    %33 = vrot.lane.b32.xlu0 %v31, 127
    %v34 = vpop.permute.xlu0 %33
    %v36 = vsub.f32 %v31, %v34
    %v37 = vsel %vm28, %v36, 0.0
    %38 = vadd.xlane.f32.xlu0 %v37
    %v39 = vpop.xlane.xlu0 %38
    %v40 = vrot.slane %v39, 4
    %v41 = vadd.f32 %v39, %v40
    %v42 = vrot.slane %v41, 2
    %v43 = vadd.f32 %v41, %v42
    %v44 = vrot.slane %v43, 1
    %v45 = vadd.f32 %v43, %v44
    %s46 = vtos %v45
    %v47 = vstv %s46
    %vm48 = vcmask 0
    %49 = vst.msk [vmem:[#allocation2] sm:$0x1] %vm48, %v47
    // Predicated region
    $region10: #{tpu_custom_call.1} parent=1 // pred_check
      _
    $region11: #{tpu_custom_call.1} parent=1 // pred_check_branch
      %51 = sbr.rel (0) target = $region13
    $region12: #{tpu_custom_call.1} parent=1 // pred_region
      %s53 = ssub.s32 16, 16
      %54 = vsyncadd [#allocation3], %s53
      %s56 = sshll.u32 [#allocation2], 4
      %s57 = int_to_ptr.vmem [resolvable:$true] %s56
      %59 = dma.vmem_to_hbm [thread:$0]  %s57, 16, %s2, [#allocation3]
    $region13: #{tpu_custom_call.1} parent=1 // pred_fallthru
      _
    // Predicated region
    $region14: #{tpu_custom_call.1} parent=1 // pred_check
      _
    $region15: #{tpu_custom_call.1} parent=1 // pred_check_branch
      %61 = sbr.rel (0) target = $region17
    $region16: #{tpu_custom_call.1} parent=1 // pred_region
      %62 = dma.done [#allocation3], 16
    $region17: #{tpu_custom_call.1} parent=1 // pred_fallthru
      _
    %63 = vsyncpa [#allocation3], 1

</llo_original>
